<compile_context>
chip_gen: v6e
topology: v6e:2x2x1
jax: 0.10.0
libtpu: 0.0.40
codegen_flags: <defaults>
</compile_context>

<pallas_src>
import functools

import jax
import jax.numpy as jnp
from jax.experimental import pallas as pl
from jax.experimental.pallas import tpu as pltpu

_LANE = 128       # lane width of a vreg (last dim)
_SUBLANE = 8      # f32 sublane count (second-to-last dim)
_TB_CHOICES = (16, 128, 512)   # static batch-tile set (multiples of 16 so both
                               # f32 and bf16 state tiles are layout friendly)


def _round_up(x, m):
    return ((x + m - 1) // m) * m


def _pad2d(a, rows, cols):
    r, c = a.shape
    if r == rows and c == cols:
        return a
    return jnp.pad(a, ((0, rows - r), (0, cols - c)))


def _actor_kernel(max_action, state_ref, w1_ref, b1_ref, w2_ref, b2_ref,
                  w3_ref, b3_ref, out_ref):
    """One batch tile: 3 MXU matmuls with f32 accumulation + f32 epilogue."""
    wdt = w1_ref.dtype                       # MXU input dtype (bf16 or f32)
    x = state_ref[...]                       # [TB, S] already in wdt

    h1 = jnp.dot(x, w1_ref[...],
                 preferred_element_type=jnp.float32) + b1_ref[...]
    h1 = jnp.maximum(h1, 0.0)                # relu, f32 on the VPU

    h2 = jnp.dot(h1.astype(wdt), w2_ref[...],
                 preferred_element_type=jnp.float32) + b2_ref[...]
    h2 = jnp.maximum(h2, 0.0)                # relu, f32 on the VPU

    logits = jnp.dot(h2.astype(wdt), w3_ref[...],
                     preferred_element_type=jnp.float32) + b3_ref[...]
    # max_action is a trace-time Python constant folded into the epilogue.
    out_ref[...] = (jax.nn.sigmoid(logits) * max_action).astype(out_ref.dtype)


def init_actor_params(key, state_dim, hidden_dim, action_dim):
    """nn.Linear-style init U(-1/sqrt(fan_in), 1/sqrt(fan_in)).
    Weights stored transposed: [in_features, out_features]; biases [1, out]."""
    ks = jax.random.split(key, 6)

    def linear(kw, kb, fan_in, fan_out):
        bound = 1.0 / jnp.sqrt(fan_in)
        w = jax.random.uniform(kw, (fan_in, fan_out), jnp.float32, -bound, bound)
        b = jax.random.uniform(kb, (1, fan_out), jnp.float32, -bound, bound)
        return w, b

    w1, b1 = linear(ks[0], ks[1], state_dim, hidden_dim)
    w2, b2 = linear(ks[2], ks[3], hidden_dim, hidden_dim)
    w3, b3 = linear(ks[4], ks[5], hidden_dim, action_dim)
    return {"w1": w1, "b1": b1, "w2": w2, "b2": b2, "w3": w3, "b3": b3}


def prepare_actor_params(params, weight_dtype=jnp.bfloat16):
    """One-time (off the hot path) weight layout prep:
      * state_dim rounded up to 8 sublanes only (usually a no-op),
      * hidden_dim padded to 128 lanes (weights are VMEM-resident, so this
        costs no HBM stream; padded lanes stay exactly zero through relu),
      * action_dim kept at its natural width (no output write amplification),
      * weights cast to `weight_dtype` (bf16 works on v5e/v6e/v7x MXUs),
        biases stay f32."""
    S, H = params["w1"].shape
    A = params["w3"].shape[1]
    S_min = _round_up(S, _SUBLANE)
    H_pad = _round_up(H, _LANE)
    prepared = {
        "w1": _pad2d(params["w1"], S_min, H_pad).astype(weight_dtype),
        "b1": _pad2d(params["b1"], 1, H_pad).astype(jnp.float32),
        "w2": _pad2d(params["w2"], H_pad, H_pad).astype(weight_dtype),
        "b2": _pad2d(params["b2"], 1, H_pad).astype(jnp.float32),
        "w3": _pad2d(params["w3"], H_pad, A).astype(weight_dtype),
        "b3": params["b3"].astype(jnp.float32),
    }
    dims = {"state_dim": S, "hidden_dim": H, "action_dim": A}
    return prepared, dims


def _pick_batch_tile(B):
    """Static tile set -> at most len(_TB_CHOICES) distinct traces."""
    for t in _TB_CHOICES:
        if B <= t:
            return t
    return _TB_CHOICES[-1]


def actor_forward(state, prepared, dims, max_action):
    """state: [B, state_dim] f32.  prepared/dims from prepare_actor_params."""
    B, S = state.shape
    S_min = prepared["w1"].shape[0]
    H_pad = prepared["w2"].shape[0]
    A = prepared["w3"].shape[1]
    wdt = prepared["w1"].dtype

    TB = _pick_batch_tile(B)
    B_pad = _round_up(B, TB)
    grid = (B_pad // TB,)

    # Stream the state in the MXU compute dtype (bf16 halves the dominant DMA).
    state_c = state.astype(wdt)
    if (B_pad, S_min) != (B, S):
        state_c = _pad2d(state_c, B_pad, S_min)

    w_bytes = jnp.dtype(wdt).itemsize
    weight_elems = S_min * H_pad + H_pad * H_pad + H_pad * A
    bias_elems = 2 * H_pad + A

    flops = 2 * B_pad * (S_min * H_pad + H_pad * H_pad + H_pad * A)
    bytes_accessed = (B_pad * S_min * w_bytes + B_pad * A * 4
                      + weight_elems * w_bytes + bias_elems * 4)

    # VMEM budget: double-buffered streamed tiles, weights (allow for the
    # conservative case of constant-index blocks being double-buffered),
    # f32 intermediates + casts; 2x headroom, clamped generation-aware.
    vmem_needed = (2 * TB * S_min * w_bytes
                   + 2 * TB * A * 4
                   + 2 * weight_elems * w_bytes
                   + 2 * bias_elems * 4
                   + 4 * TB * H_pad * 4)
    try:
        vmem_cap = int(pltpu.get_tpu_info().vmem_capacity_bytes)
    except Exception:
        vmem_cap = 64 * 1024 * 1024          # v7x per-TC capacity (worst case)
    vmem_limit = int(min(max(2 * vmem_needed, 16 * 1024 * 1024),
                         int(0.6 * vmem_cap)))

    kernel = functools.partial(_actor_kernel, float(max_action))

    out = pl.pallas_call(
        kernel,
        out_shape=jax.ShapeDtypeStruct((B_pad, A), jnp.float32),
        grid=grid,
        in_specs=[
            pl.BlockSpec((TB, S_min), lambda i: (i, 0)),     # state: streamed
            pl.BlockSpec((S_min, H_pad), lambda i: (0, 0)),  # W1: VMEM-resident
            pl.BlockSpec((1, H_pad), lambda i: (0, 0)),      # b1
            pl.BlockSpec((H_pad, H_pad), lambda i: (0, 0)),  # W2
            pl.BlockSpec((1, H_pad), lambda i: (0, 0)),      # b2
            pl.BlockSpec((H_pad, A), lambda i: (0, 0)),      # W3
            pl.BlockSpec((1, A), lambda i: (0, 0)),          # b3
        ],
        out_specs=pl.BlockSpec((TB, A), lambda i: (i, 0)),
        compiler_params=pltpu.CompilerParams(
            dimension_semantics=("parallel",),               # megacore on v7x
            vmem_limit_bytes=vmem_limit,
        ),
        cost_estimate=pl.CostEstimate(
            flops=flops,
            transcendentals=B_pad * A,
            bytes_accessed=bytes_accessed,
        ),
    )(state_c, prepared["w1"], prepared["b1"], prepared["w2"],
      prepared["b2"], prepared["w3"], prepared["b3"])

    # Only padded batch rows (if any) need trimming; action width is already
    # natural, so no lane slice pass.
    return out[:B] if B_pad != B else out


if __name__ == "__main__":
    key = jax.random.PRNGKey(0)
    k_state, k_params, k_big = jax.random.split(key, 3)

    batch, state_dim, hidden_dim, action_dim = 2, 16, 32, 4
    max_action = 1.0

    state = jax.random.normal(k_state, (batch, state_dim), jnp.float32)
    params = init_actor_params(k_params, state_dim, hidden_dim, action_dim)

    # Pure f32 reference matching the PyTorch module semantics.
    def ref_f32(x):
        h = jnp.maximum(x @ params["w1"] + params["b1"], 0.0)
        h = jnp.maximum(h @ params["w2"] + params["b2"], 0.0)
        return jax.nn.sigmoid(h @ params["w3"] + params["b3"]) * max_action

    # --- f32 weight path: exact-semantics check ---
    prep_f32, dims = prepare_actor_params(params, weight_dtype=jnp.float32)
    act_f32 = actor_forward(state, prep_f32, dims, max_action)
    jax.block_until_ready(act_f32)
    assert act_f32.shape == (batch, action_dim)
    assert jnp.allclose(act_f32, ref_f32(state), atol=1e-5), "f32 path mismatch"

    # --- bf16 weight path (default), f32 accumulation + f32 epilogue ---
    prep_bf16, dims = prepare_actor_params(params, weight_dtype=jnp.bfloat16)
    act_bf16 = actor_forward(state, prep_bf16, dims, max_action)
    jax.block_until_ready(act_bf16)

    def ref_bf16(x):
        def mm(a, w):
            return jnp.dot(a.astype(jnp.bfloat16), w.astype(jnp.bfloat16),
                           preferred_element_type=jnp.float32)
        h = jnp.maximum(mm(x, params["w1"]) + params["b1"], 0.0)
        h = jnp.maximum(mm(h, params["w2"]) + params["b2"], 0.0)
        return jax.nn.sigmoid(mm(h, params["w3"]) + params["b3"]) * max_action

    assert act_bf16.shape == (batch, action_dim)
    assert jnp.allclose(act_bf16, ref_bf16(state), atol=1e-3, rtol=1e-3), \
        "bf16 path mismatch vs bf16-emulating reference"
    assert jnp.allclose(act_bf16, ref_f32(state), atol=2e-2), \
        "bf16 path drifted too far from f32 semantics"

    # --- exercise a multi-tile grid + batch-row trimming path ---
    big_state = jax.random.normal(k_big, (300, state_dim), jnp.float32)
    act_big = actor_forward(big_state, prep_f32, dims, max_action)
    jax.block_until_ready(act_big)
    assert act_big.shape == (300, action_dim)
    assert jnp.allclose(act_big, ref_f32(big_state), atol=1e-5), \
        "multi-tile f32 path mismatch"

    print("KERNEL_OK")
</pallas_src>

<mosaic_0001>
module attributes {stable_mosaic.version = 11 : i64} {
  func.func @_actor_kernel(%arg0: i32, %arg1: memref<16x16xf32, #tpu.memory_space<vmem>>, %arg2: memref<16x128xf32, #tpu.memory_space<vmem>>, %arg3: memref<1x128xf32, #tpu.memory_space<vmem>>, %arg4: memref<128x128xf32, #tpu.memory_space<vmem>>, %arg5: memref<1x128xf32, #tpu.memory_space<vmem>>, %arg6: memref<128x4xf32, #tpu.memory_space<vmem>>, %arg7: memref<1x4xf32, #tpu.memory_space<vmem>>, %arg8: memref<16x4xf32, #tpu.memory_space<vmem>>) attributes {dimension_semantics = [#tpu.dimension_semantics<parallel>], iteration_bounds = array<i64: 1>, scalar_prefetch = 0 : i64, scratch_operands = 0 : i64, tpu.core_type = #tpu.core_type<tc>, window_params = [{transform_indices = @transform_0, window_bounds = array<i64: 16, 16>}, {pipeline_mode = #tpu.pipeline_mode<synchronous>, transform_indices = @transform_1, window_bounds = array<i64: 16, 128>}, {pipeline_mode = #tpu.pipeline_mode<synchronous>, transform_indices = @transform_2, window_bounds = array<i64: 1, 128>}, {pipeline_mode = #tpu.pipeline_mode<synchronous>, transform_indices = @transform_3, window_bounds = array<i64: 128, 128>}, {pipeline_mode = #tpu.pipeline_mode<synchronous>, transform_indices = @transform_4, window_bounds = array<i64: 1, 128>}, {pipeline_mode = #tpu.pipeline_mode<synchronous>, transform_indices = @transform_5, window_bounds = array<i64: 128, 4>}, {pipeline_mode = #tpu.pipeline_mode<synchronous>, transform_indices = @transform_6, window_bounds = array<i64: 1, 4>}, {transform_indices = @transform_7, window_bounds = array<i64: 16, 4>}]} {
    %c0 = arith.constant 0 : index
    %c0_0 = arith.constant 0 : index
    %0 = vector.load %arg1[%c0, %c0_0] : memref<16x16xf32, #tpu.memory_space<vmem>>, vector<16x16xf32>
    %c0_1 = arith.constant 0 : index
    %c0_2 = arith.constant 0 : index
    %1 = vector.load %arg2[%c0_1, %c0_2] : memref<16x128xf32, #tpu.memory_space<vmem>>, vector<16x128xf32>
    %cst = arith.constant dense<0.000000e+00> : vector<16x128xf32>
    %2 = tpu.matmul %0, %1, %cst {dimension_numbers = #tpu.dot_dimension_numbers<[1], [0], [0], [1], [0, 0, 1, 1], [], []>} : vector<16x16xf32>, vector<16x128xf32>, vector<16x128xf32> -> vector<16x128xf32>
    %c0_3 = arith.constant 0 : index
    %c0_4 = arith.constant 0 : index
    %3 = vector.load %arg3[%c0_3, %c0_4] : memref<1x128xf32, #tpu.memory_space<vmem>>, vector<1x128xf32>
    %4 = vector.broadcast %3 : vector<1x128xf32> to vector<16x128xf32>
    %5 = arith.addf %2, %4 : vector<16x128xf32>
    %cst_5 = arith.constant 0.000000e+00 : f32
    %6 = vector.broadcast %cst_5 : f32 to vector<16x128xf32>
    %7 = arith.maximumf %5, %6 : vector<16x128xf32>
    %c0_6 = arith.constant 0 : index
    %c0_7 = arith.constant 0 : index
    %8 = vector.load %arg4[%c0_6, %c0_7] : memref<128x128xf32, #tpu.memory_space<vmem>>, vector<128x128xf32>
    %cst_8 = arith.constant dense<0.000000e+00> : vector<16x128xf32>
    %9 = tpu.matmul %7, %8, %cst_8 {dimension_numbers = #tpu.dot_dimension_numbers<[1], [0], [0], [1], [0, 0, 1, 1], [], []>} : vector<16x128xf32>, vector<128x128xf32>, vector<16x128xf32> -> vector<16x128xf32>
    %c0_9 = arith.constant 0 : index
    %c0_10 = arith.constant 0 : index
    %10 = vector.load %arg5[%c0_9, %c0_10] : memref<1x128xf32, #tpu.memory_space<vmem>>, vector<1x128xf32>
    %11 = vector.broadcast %10 : vector<1x128xf32> to vector<16x128xf32>
    %12 = arith.addf %9, %11 : vector<16x128xf32>
    %cst_11 = arith.constant 0.000000e+00 : f32
    %13 = vector.broadcast %cst_11 : f32 to vector<16x128xf32>
    %14 = arith.maximumf %12, %13 : vector<16x128xf32>
    %c0_12 = arith.constant 0 : index
    %c0_13 = arith.constant 0 : index
    %15 = vector.load %arg6[%c0_12, %c0_13] : memref<128x4xf32, #tpu.memory_space<vmem>>, vector<128x4xf32>
    %cst_14 = arith.constant dense<0.000000e+00> : vector<16x4xf32>
    %16 = tpu.matmul %14, %15, %cst_14 {dimension_numbers = #tpu.dot_dimension_numbers<[1], [0], [0], [1], [0, 0, 1, 1], [], []>} : vector<16x128xf32>, vector<128x4xf32>, vector<16x4xf32> -> vector<16x4xf32>
    %c0_15 = arith.constant 0 : index
    %c0_16 = arith.constant 0 : index
    %17 = vector.load %arg7[%c0_15, %c0_16] : memref<1x4xf32, #tpu.memory_space<vmem>>, vector<1x4xf32>
    %18 = vector.broadcast %17 : vector<1x4xf32> to vector<16x4xf32>
    %19 = arith.addf %16, %18 : vector<16x4xf32>
    %20 = arith.negf %19 : vector<16x4xf32>
    %21 = math.exp %20 : vector<16x4xf32>
    %cst_17 = arith.constant 1.000000e+00 : f32
    %22 = vector.broadcast %cst_17 : f32 to vector<16x4xf32>
    %23 = arith.addf %22, %21 : vector<16x4xf32>
    %24 = arith.divf %22, %23 : vector<16x4xf32>
    %cst_18 = arith.constant 1.000000e+00 : f32
    %25 = vector.broadcast %cst_18 : f32 to vector<16x4xf32>
    %26 = arith.mulf %24, %25 : vector<16x4xf32>
    %c0_19 = arith.constant 0 : index
    %c0_20 = arith.constant 0 : index
    %27 = vector.load %arg8[%c0_19, %c0_20] : memref<16x4xf32, #tpu.memory_space<vmem>>, vector<16x4xf32>
    tpu.vector_store %arg8[%c0_19, %c0_20], %26 {strides = array<i32>} : memref<16x4xf32, #tpu.memory_space<vmem>>, vector<16x4xf32>,
    return
  }
  func.func @transform_0(%arg0: i32) -> (i32, i32) {
    %c0_i32 = arith.constant 0 : i32
    %c0_i32_0 = arith.constant 0 : i32
    return %arg0, %c0_i32 : i32, i32
  }
  func.func @transform_1(%arg0: i32) -> (i32, i32) {
    %c0_i32 = arith.constant 0 : i32
    %c0_i32_0 = arith.constant 0 : i32
    %c0_i32_1 = arith.constant 0 : i32
    return %c0_i32, %c0_i32_0 : i32, i32
  }
  func.func @transform_2(%arg0: i32) -> (i32, i32) {
    %c0_i32 = arith.constant 0 : i32
    %c0_i32_0 = arith.constant 0 : i32
    %c0_i32_1 = arith.constant 0 : i32
    return %c0_i32, %c0_i32_0 : i32, i32
  }
  func.func @transform_3(%arg0: i32) -> (i32, i32) {
    %c0_i32 = arith.constant 0 : i32
    %c0_i32_0 = arith.constant 0 : i32
    %c0_i32_1 = arith.constant 0 : i32
    return %c0_i32, %c0_i32_0 : i32, i32
  }
  func.func @transform_4(%arg0: i32) -> (i32, i32) {
    %c0_i32 = arith.constant 0 : i32
    %c0_i32_0 = arith.constant 0 : i32
    %c0_i32_1 = arith.constant 0 : i32
    return %c0_i32, %c0_i32_0 : i32, i32
  }
  func.func @transform_5(%arg0: i32) -> (i32, i32) {
    %c0_i32 = arith.constant 0 : i32
    %c0_i32_0 = arith.constant 0 : i32
    %c0_i32_1 = arith.constant 0 : i32
    return %c0_i32, %c0_i32_0 : i32, i32
  }
  func.func @transform_6(%arg0: i32) -> (i32, i32) {
    %c0_i32 = arith.constant 0 : i32
    %c0_i32_0 = arith.constant 0 : i32
    %c0_i32_1 = arith.constant 0 : i32
    return %c0_i32, %c0_i32_0 : i32, i32
  }
  func.func @transform_7(%arg0: i32) -> (i32, i32) {
    %c0_i32 = arith.constant 0 : i32
    %c0_i32_0 = arith.constant 0 : i32
    return %arg0, %c0_i32 : i32, i32
  }
}

</mosaic_0001>

<llo_original>
// kernel: tpu_custom_call.1
$region0: #{tpu_custom_call.1}
  #allocation0 [shape = 'u32[]', space=smem, size = 0x4, offset = 0x4, fixed_abs, tag = 'smem constant byte address 0x4 - core index']
  #allocation1 [shape = 'u32[144,128]{1,0:T(1,128)}', space=vmem, size = 0x12000, scoped, tag = 'internal scratch']
  %s0 = inlined_call_operand.hbm [shape: f32[16,16], index: 0, kind: input, shape index: {}]
  %s1 = inlined_call_operand.hbm [shape: f32[16,128], index: 1, kind: input, shape index: {}]
  %s2 = inlined_call_operand.vmem [shape: f32[1,128], index: 2, kind: input, shape index: {}]
  %s3 = inlined_call_operand.vmem [shape: f32[128,128], index: 3, kind: input, shape index: {}]
  %s4 = inlined_call_operand.vmem [shape: f32[1,128], index: 4, kind: input, shape index: {}]
  %s5 = inlined_call_operand.vmem [shape: f32[128,4], index: 5, kind: input, shape index: {}]
  %s6 = inlined_call_operand.vmem [shape: f32[1,4], index: 6, kind: input, shape index: {}]
  %s7 = inlined_call_operand.vmem [shape: f32[16,4], index: 7, kind: output, shape index: {}]
  %s8 = sld [smem:[#allocation0]]
  $region46: #{tpu_custom_call.1} parent=0
    _
  %s10 = ssub.s32 1, %s8
  %s11 = scalar_select 0, %s10, %s8
  $region1: #{tpu_custom_call.1} parent=0
    #allocation2 [shape = 'u8[8192]{0}', space=vmem, size = 0x2000, scoped, tag = 'input window, operand 0, single buffered']
    #allocation3 [shape = 's32[1]{0}', space=sflag, size = 0x4, scoped, tag = 'scoped memory for tpu_custom_call.1']
    #allocation4 [shape = 'u8[8192]{0}', space=vmem, size = 0x2000, scoped, tag = 'input window, operand 1, single buffered']
    #allocation5 [shape = 's32[1]{0}', space=sflag, size = 0x4, scoped, tag = 'scoped memory for tpu_custom_call.1']
    %12 = vsyncpa [#allocation3], 0
    %13 = vsyncpa [#allocation5], 0
    // Predicated region
    $region2: #{tpu_custom_call.1} parent=1 // pred_check
      _
    $region3: #{tpu_custom_call.1} parent=1 // pred_check_branch
      %15 = sbr.rel (0) target = $region5
    $region4: #{tpu_custom_call.1} parent=1 // pred_region
      %s17 = ssub.s32 256, 256
      %18 = vsyncadd [#allocation3], %s17
      %s19 = sshll.u32 [#allocation2], 4
      %s20 = int_to_ptr.vmem [resolvable:$true] %s19
      %25 = dma.hbm_to_vmem [thread:$0]  %s0, 256, %s20, [#allocation3], 128, 128, 8
    $region5: #{tpu_custom_call.1} parent=1 // pred_fallthru
      _
    // Predicated region
    $region6: #{tpu_custom_call.1} parent=1 // pred_check
      _
    $region7: #{tpu_custom_call.1} parent=1 // pred_check_branch
      %27 = sbr.rel (0) target = $region9
    $region8: #{tpu_custom_call.1} parent=1 // pred_region
      %s29 = ssub.s32 256, 256
      %30 = vsyncadd [#allocation5], %s29
      %s31 = sshll.u32 [#allocation4], 4
      %s32 = int_to_ptr.vmem [resolvable:$true] %s31
      %37 = dma.hbm_to_vmem [thread:$0]  %s1, 256, %s32, [#allocation5], 128, 128, 8
    $region9: #{tpu_custom_call.1} parent=1 // pred_fallthru
      _
    // Predicated region
    $region10: #{tpu_custom_call.1} parent=1 // pred_check
      _
    $region11: #{tpu_custom_call.1} parent=1 // pred_check_branch
      %39 = sbr.rel (0) target = $region13
    $region12: #{tpu_custom_call.1} parent=1 // pred_region
      _
    $region13: #{tpu_custom_call.1} parent=1 // pred_fallthru
      _
    // Predicated region
    $region14: #{tpu_custom_call.1} parent=1 // pred_check
      _
    $region15: #{tpu_custom_call.1} parent=1 // pred_check_branch
      %41 = sbr.rel (0) target = $region17
    $region16: #{tpu_custom_call.1} parent=1 // pred_region
      _
    $region17: #{tpu_custom_call.1} parent=1 // pred_fallthru
      _
    // Predicated region
    $region18: #{tpu_custom_call.1} parent=1 // pred_check
      _
    $region19: #{tpu_custom_call.1} parent=1 // pred_check_branch
      %43 = sbr.rel (0) target = $region21
    $region20: #{tpu_custom_call.1} parent=1 // pred_region
      _
    $region21: #{tpu_custom_call.1} parent=1 // pred_fallthru
      _
    // Predicated region
    $region22: #{tpu_custom_call.1} parent=1 // pred_check
      _
    $region23: #{tpu_custom_call.1} parent=1 // pred_check_branch
      %45 = sbr.rel (0) target = $region25
    $region24: #{tpu_custom_call.1} parent=1 // pred_region
      _
    $region25: #{tpu_custom_call.1} parent=1 // pred_fallthru
      _
    // Predicated region
    $region26: #{tpu_custom_call.1} parent=1 // pred_check
      _
    $region27: #{tpu_custom_call.1} parent=1 // pred_check_branch
      %47 = sbr.rel (0) target = $region29
    $region28: #{tpu_custom_call.1} parent=1 // pred_region
      _
    $region29: #{tpu_custom_call.1} parent=1 // pred_fallthru
      _
    // Predicated region
    $region30: #{tpu_custom_call.1} parent=1 // pred_check
      _
    $region31: #{tpu_custom_call.1} parent=1 // pred_check_branch
      %49 = sbr.rel (0) target = $region33
    $region32: #{tpu_custom_call.1} parent=1 // pred_region
      %50 = dma.done [#allocation3], 256
    $region33: #{tpu_custom_call.1} parent=1 // pred_fallthru
      _
    // Predicated region
    $region34: #{tpu_custom_call.1} parent=1 // pred_check
      _
    $region35: #{tpu_custom_call.1} parent=1 // pred_check_branch
      %52 = sbr.rel (0) target = $region37
    $region36: #{tpu_custom_call.1} parent=1 // pred_region
      %53 = dma.done [#allocation5], 256
    $region37: #{tpu_custom_call.1} parent=1 // pred_fallthru
      _
    %v54 = vld [vmem:[#allocation2] sm:$0xff]
    %v55 = vld [vmem:[#allocation2 + $0x8] sm:$0xff]
    %v56 = vld [vmem:[#allocation4] sm:$0xff]
    %v57 = vld [vmem:[#allocation4 + $0x8] sm:$0xff]
    %v58 = vld [vmem:[%s2] sm:$0x1]
    %v60 = vlaneseq
    %v61 = vshrl.u32 %v60, 7
    %v62 = vsub.s32 0, %v61
    %v63 = vrot.slane %v58, %v62
    %vm65 = vcmask 130048
    %v67 = vsel %vm65, %v54, 0
    %v70 = vsel %vm65, %v55, 0
    %72 = vmatprep.subr.mxu0 0.0
    %73 = vmatpush1.msra.mxu0 0.0
    %74 = vmatprep.subr.mxu0 0.0
    %75 = vmatpush1.msra.mxu0 0.0
    %76 = vmatprep.subr.mxu0 0.0
    %77 = vmatpush1.msra.mxu0 0.0
    %78 = vmatprep.subr.mxu0 0.0
    %79 = vmatpush1.msra.mxu0 0.0
    %80 = vmatprep.subr.mxu0 0.0
    %81 = vmatpush1.msra.mxu0 0.0
    %82 = vmatprep.subr.mxu0 0.0
    %83 = vmatpush1.msra.mxu0 0.0
    %84 = vmatprep.subr.mxu0 0.0
    %85 = vmatpush1.msra.mxu0 0.0
    %86 = vmatprep.subr.mxu0 0.0
    %87 = vmatpush1.msra.mxu0 0.0
    %88 = vmatprep.subr.mxu0 0.0
    %89 = vmatpush1.msra.mxu0 0.0
    %90 = vmatprep.subr.mxu0 0.0
    %91 = vmatpush1.msra.mxu0 0.0
    %92 = vmatprep.subr.mxu0 0.0
    %93 = vmatpush1.msra.mxu0 0.0
    %94 = vmatprep.subr.mxu0 0.0
    %95 = vmatpush1.msra.mxu0 0.0
    %96 = vmatprep.subr.mxu0 0.0
    %97 = vmatpush1.msra.mxu0 0.0
    %98 = vmatprep.subr.mxu0 0.0
    %99 = vmatpush1.msra.mxu0 0.0
    %100 = vmatprep.subr.mxu0 0.0
    %101 = vmatpush1.msra.mxu0 %v57
    %102 = vmatprep.subr.mxu0 0.0
    %103 = vmatpush1.msra.mxu0 %v56
    %104 = vmatprep.subr.mxu0 0.0
    %105 = vmatpush2.msra.mxu0 0.0
    %106 = vmatprep.subr.mxu0 0.0
    %107 = vmatpush2.msra.mxu0 0.0
    %108 = vmatprep.subr.mxu0 0.0
    %109 = vmatpush2.msra.mxu0 0.0
    %110 = vmatprep.subr.mxu0 0.0
    %111 = vmatpush2.msra.mxu0 0.0
    %112 = vmatprep.subr.mxu0 0.0
    %113 = vmatpush2.msra.mxu0 0.0
    %114 = vmatprep.subr.mxu0 0.0
    %115 = vmatpush2.msra.mxu0 0.0
    %116 = vmatprep.subr.mxu0 0.0
    %117 = vmatpush2.msra.mxu0 0.0
    %118 = vmatprep.subr.mxu0 0.0
    %119 = vmatpush2.msra.mxu0 0.0
    %120 = vmatprep.subr.mxu0 0.0
    %121 = vmatpush2.msra.mxu0 0.0
    %122 = vmatprep.subr.mxu0 0.0
    %123 = vmatpush2.msra.mxu0 0.0
    %124 = vmatprep.subr.mxu0 0.0
    %125 = vmatpush2.msra.mxu0 0.0
    %126 = vmatprep.subr.mxu0 0.0
    %127 = vmatpush2.msra.mxu0 0.0
    %128 = vmatprep.subr.mxu0 0.0
    %129 = vmatpush2.msra.mxu0 0.0
    %130 = vmatprep.subr.mxu0 0.0
    %131 = vmatpush2.msra.mxu0 0.0
    %132 = vmatprep.subr.mxu0 0.0
    %133 = vmatpush2.msra.mxu0 0.0
    %134 = vmatprep.subr.mxu0 0.0
    %135 = vmatpush2.msra.mxu0 0.0
    %136 = vmatprep.mubr.f32.mxu0 0.0
    %137 = vmatmul.mubr.f32.gmra.mxu0 %v67
    %v138 = vpop.f32.mrf.mxu0
    %v139 = vadd.f32 %v63, %v138
    %v140 = vpop.f32.mrf.mxu0
    %141 = vmatprep.mubr.f32.mxu0 0.0
    %142 = vmatmul.mubr.f32.gmra.mxu0 %v70
    %v143 = vpop.f32.mrf.mxu0
    %v144 = vadd.f32 %v63, %v143
    %v145 = vpop.f32.mrf.mxu0
    %146 = vdwg.mxu0
    %v147 = vmax.f32 %v139, 0.0
    %v148 = vmax.f32 %v144, 0.0
    %v149 = vld [vmem:[%s3] sm:$0xff]
    %v150 = vld [vmem:[%s3 + $0x8] sm:$0xff]
    %v151 = vld [vmem:[%s3 + $0x10] sm:$0xff]
    %v152 = vld [vmem:[%s3 + $0x18] sm:$0xff]
    %v153 = vld [vmem:[%s3 + $0x20] sm:$0xff]
    %v154 = vld [vmem:[%s3 + $0x28] sm:$0xff]
    %v155 = vld [vmem:[%s3 + $0x30] sm:$0xff]
    %v156 = vld [vmem:[%s3 + $0x38] sm:$0xff]
    %v157 = vld [vmem:[%s3 + $0x40] sm:$0xff]
    %v158 = vld [vmem:[%s3 + $0x48] sm:$0xff]
    %v159 = vld [vmem:[%s3 + $0x50] sm:$0xff]
    %v160 = vld [vmem:[%s3 + $0x58] sm:$0xff]
    %v161 = vld [vmem:[%s3 + $0x60] sm:$0xff]
    %v162 = vld [vmem:[%s3 + $0x68] sm:$0xff]
    %v163 = vld [vmem:[%s3 + $0x70] sm:$0xff]
    %v164 = vld [vmem:[%s3 + $0x78] sm:$0xff]
    %v165 = vld [vmem:[%s4] sm:$0x1]
    %v167 = vlaneseq
    %v168 = vshrl.u32 %v167, 7
    %v169 = vsub.s32 0, %v168
    %v170 = vrot.slane %v165, %v169
    %172 = vmatprep.subr.mxu0 0.0
    %173 = vmatpush1.msra.mxu0 %v164
    %174 = vmatprep.subr.mxu0 0.0
    %175 = vmatpush1.msra.mxu0 %v163
    %176 = vmatprep.subr.mxu0 0.0
    %177 = vmatpush1.msra.mxu0 %v162
    %178 = vmatprep.subr.mxu0 0.0
    %179 = vmatpush1.msra.mxu0 %v161
    %180 = vmatprep.subr.mxu0 0.0
    %181 = vmatpush1.msra.mxu0 %v160
    %182 = vmatprep.subr.mxu0 0.0
    %183 = vmatpush1.msra.mxu0 %v159
    %184 = vmatprep.subr.mxu0 0.0
    %185 = vmatpush1.msra.mxu0 %v158
    %186 = vmatprep.subr.mxu0 0.0
    %187 = vmatpush1.msra.mxu0 %v157
    %188 = vmatprep.subr.mxu0 0.0
    %189 = vmatpush1.msra.mxu0 %v156
    %190 = vmatprep.subr.mxu0 0.0
    %191 = vmatpush1.msra.mxu0 %v155
    %192 = vmatprep.subr.mxu0 0.0
    %193 = vmatpush1.msra.mxu0 %v154
    %194 = vmatprep.subr.mxu0 0.0
    %195 = vmatpush1.msra.mxu0 %v153
    %196 = vmatprep.subr.mxu0 0.0
    %197 = vmatpush1.msra.mxu0 %v152
    %198 = vmatprep.subr.mxu0 0.0
    %199 = vmatpush1.msra.mxu0 %v151
    %200 = vmatprep.subr.mxu0 0.0
    %201 = vmatpush1.msra.mxu0 %v150
    %202 = vmatprep.subr.mxu0 0.0
    %203 = vmatpush1.msra.mxu0 %v149
    %204 = vmatprep.subr.mxu0 0.0
    %205 = vmatpush2.msra.mxu0 0.0
    %206 = vmatprep.subr.mxu0 0.0
    %207 = vmatpush2.msra.mxu0 0.0
    %208 = vmatprep.subr.mxu0 0.0
    %209 = vmatpush2.msra.mxu0 0.0
    %210 = vmatprep.subr.mxu0 0.0
    %211 = vmatpush2.msra.mxu0 0.0
    %212 = vmatprep.subr.mxu0 0.0
    %213 = vmatpush2.msra.mxu0 0.0
    %214 = vmatprep.subr.mxu0 0.0
    %215 = vmatpush2.msra.mxu0 0.0
    %216 = vmatprep.subr.mxu0 0.0
    %217 = vmatpush2.msra.mxu0 0.0
    %218 = vmatprep.subr.mxu0 0.0
    %219 = vmatpush2.msra.mxu0 0.0
    %220 = vmatprep.subr.mxu0 0.0
    %221 = vmatpush2.msra.mxu0 0.0
    %222 = vmatprep.subr.mxu0 0.0
    %223 = vmatpush2.msra.mxu0 0.0
    %224 = vmatprep.subr.mxu0 0.0
    %225 = vmatpush2.msra.mxu0 0.0
    %226 = vmatprep.subr.mxu0 0.0
    %227 = vmatpush2.msra.mxu0 0.0
    %228 = vmatprep.subr.mxu0 0.0
    %229 = vmatpush2.msra.mxu0 0.0
    %230 = vmatprep.subr.mxu0 0.0
    %231 = vmatpush2.msra.mxu0 0.0
    %232 = vmatprep.subr.mxu0 0.0
    %233 = vmatpush2.msra.mxu0 0.0
    %234 = vmatprep.subr.mxu0 0.0
    %235 = vmatpush2.msra.mxu0 0.0
    %236 = vmatprep.mubr.f32.mxu0 0.0
    %237 = vmatmul.mubr.f32.gmra.mxu0 %v147
    %v238 = vpop.f32.mrf.mxu0
    %v239 = vadd.f32 %v170, %v238
    %v240 = vpop.f32.mrf.mxu0
    %241 = vmatprep.mubr.f32.mxu0 0.0
    %242 = vmatmul.mubr.f32.gmra.mxu0 %v148
    %v243 = vpop.f32.mrf.mxu0
    %v244 = vadd.f32 %v170, %v243
    %v245 = vpop.f32.mrf.mxu0
    %246 = vdwg.mxu0
    %v247 = vmax.f32 %v239, 0.0
    %v248 = vmax.f32 %v244, 0.0
    %v249 = vld [vmem:[%s5] sm:$0xff]
    %v250 = vld [vmem:[%s5 + $0x8] sm:$0xff]
    %v251 = vld [vmem:[%s5 + $0x10] sm:$0xff]
    %v252 = vld [vmem:[%s5 + $0x18] sm:$0xff]
    %v253 = vld [vmem:[%s5 + $0x20] sm:$0xff]
    %v254 = vld [vmem:[%s5 + $0x28] sm:$0xff]
    %v255 = vld [vmem:[%s5 + $0x30] sm:$0xff]
    %v256 = vld [vmem:[%s5 + $0x38] sm:$0xff]
    %v257 = vld [vmem:[%s5 + $0x40] sm:$0xff]
    %v258 = vld [vmem:[%s5 + $0x48] sm:$0xff]
    %v259 = vld [vmem:[%s5 + $0x50] sm:$0xff]
    %v260 = vld [vmem:[%s5 + $0x58] sm:$0xff]
    %v261 = vld [vmem:[%s5 + $0x60] sm:$0xff]
    %v262 = vld [vmem:[%s5 + $0x68] sm:$0xff]
    %v263 = vld [vmem:[%s5 + $0x70] sm:$0xff]
    %v264 = vld [vmem:[%s5 + $0x78] sm:$0xff]
    %v265 = vld [vmem:[%s6] sm:$0x1]
    %v267 = vlaneseq
    %v268 = vshrl.u32 %v267, 7
    %v269 = vsub.s32 0, %v268
    %v270 = vrot.slane %v265, %v269
    %272 = vmatprep.subr.mxu0 0.0
    %273 = vmatpush1.msra.mxu0 %v264
    %274 = vmatprep.subr.mxu0 0.0
    %275 = vmatpush1.msra.mxu0 %v263
    %276 = vmatprep.subr.mxu0 0.0
    %277 = vmatpush1.msra.mxu0 %v262
    %278 = vmatprep.subr.mxu0 0.0
    %279 = vmatpush1.msra.mxu0 %v261
    %280 = vmatprep.subr.mxu0 0.0
    %281 = vmatpush1.msra.mxu0 %v260
    %282 = vmatprep.subr.mxu0 0.0
    %283 = vmatpush1.msra.mxu0 %v259
    %284 = vmatprep.subr.mxu0 0.0
    %285 = vmatpush1.msra.mxu0 %v258
    %286 = vmatprep.subr.mxu0 0.0
    %287 = vmatpush1.msra.mxu0 %v257
    %288 = vmatprep.subr.mxu0 0.0
    %289 = vmatpush1.msra.mxu0 %v256
    %290 = vmatprep.subr.mxu0 0.0
    %291 = vmatpush1.msra.mxu0 %v255
    %292 = vmatprep.subr.mxu0 0.0
    %293 = vmatpush1.msra.mxu0 %v254
    %294 = vmatprep.subr.mxu0 0.0
    %295 = vmatpush1.msra.mxu0 %v253
    %296 = vmatprep.subr.mxu0 0.0
    %297 = vmatpush1.msra.mxu0 %v252
    %298 = vmatprep.subr.mxu0 0.0
    %299 = vmatpush1.msra.mxu0 %v251
    %300 = vmatprep.subr.mxu0 0.0
    %301 = vmatpush1.msra.mxu0 %v250
    %302 = vmatprep.subr.mxu0 0.0
    %303 = vmatpush1.msra.mxu0 %v249
    %304 = vmatprep.subr.mxu0 0.0
    %305 = vmatpush2.msra.mxu0 0.0
    %306 = vmatprep.subr.mxu0 0.0
    %307 = vmatpush2.msra.mxu0 0.0
    %308 = vmatprep.subr.mxu0 0.0
    %309 = vmatpush2.msra.mxu0 0.0
    %310 = vmatprep.subr.mxu0 0.0
    %311 = vmatpush2.msra.mxu0 0.0
    %312 = vmatprep.subr.mxu0 0.0
    %313 = vmatpush2.msra.mxu0 0.0
    %314 = vmatprep.subr.mxu0 0.0
    %315 = vmatpush2.msra.mxu0 0.0
    %316 = vmatprep.subr.mxu0 0.0
    %317 = vmatpush2.msra.mxu0 0.0
    %318 = vmatprep.subr.mxu0 0.0
    %319 = vmatpush2.msra.mxu0 0.0
    %320 = vmatprep.subr.mxu0 0.0
    %321 = vmatpush2.msra.mxu0 0.0
    %322 = vmatprep.subr.mxu0 0.0
    %323 = vmatpush2.msra.mxu0 0.0
    %324 = vmatprep.subr.mxu0 0.0
    %325 = vmatpush2.msra.mxu0 0.0
    %326 = vmatprep.subr.mxu0 0.0
    %327 = vmatpush2.msra.mxu0 0.0
    %328 = vmatprep.subr.mxu0 0.0
    %329 = vmatpush2.msra.mxu0 0.0
    %330 = vmatprep.subr.mxu0 0.0
    %331 = vmatpush2.msra.mxu0 0.0
    %332 = vmatprep.subr.mxu0 0.0
    %333 = vmatpush2.msra.mxu0 0.0
    %334 = vmatprep.subr.mxu0 0.0
    %335 = vmatpush2.msra.mxu0 0.0
    %336 = vmatprep.mubr.f32.mxu0 0.0
    %337 = vmatmul.mubr.f32.gmra.mxu0 %v247
    %v338 = vpop.f32.mrf.mxu0
    %v339 = vadd.f32 %v270, %v338
    %v340 = vpop.f32.mrf.mxu0
    %341 = vmatprep.mubr.f32.mxu0 0.0
    %342 = vmatmul.mubr.f32.gmra.mxu0 %v248
    %v343 = vpop.f32.mrf.mxu0
    %v344 = vadd.f32 %v270, %v343
    %v345 = vpop.f32.mrf.mxu0
    %346 = vdwg.mxu0
    %v347 = vxor.u32 %v339, 2147483648
    %v348 = vxor.u32 %v344, 2147483648
    %v349 = vmul.f32 %v347, 1.442695
    %v350 = vpow.pop %v349
    %v351 = vmul.f32 %v348, 1.442695
    %v352 = vpow.pop %v351
    %v353 = vadd.f32 %v350, 1.0
    %v354 = vadd.f32 %v352, 1.0
    %v355 = vrcp.pop %v353
    %v356 = vmul.f32 1.0, %v355
    %v357 = vrcp.pop %v354
    %v358 = vmul.f32 1.0, %v357
    %vm359 = vcmask 31744
    %360 = vst.msk [vmem:[%s7] sm:$0xff] %vm359, %v356
    %361 = vst.msk [vmem:[%s7 + $0x8] sm:$0xff] %vm359, %v358
    // Predicated region
    $region38: #{tpu_custom_call.1} parent=1 // pred_check
      _
    $region39: #{tpu_custom_call.1} parent=1 // pred_check_branch
      %363 = sbr.rel (0) target = $region41
    $region40: #{tpu_custom_call.1} parent=1 // pred_region
      _
    $region41: #{tpu_custom_call.1} parent=1 // pred_fallthru
      _
    // Predicated region
    $region42: #{tpu_custom_call.1} parent=1 // pred_check
      _
    $region43: #{tpu_custom_call.1} parent=1 // pred_check_branch
      %365 = sbr.rel (0) target = $region45
    $region44: #{tpu_custom_call.1} parent=1 // pred_region
      _
    $region45: #{tpu_custom_call.1} parent=1 // pred_fallthru
      _
    %366 = vsyncpa [#allocation3], 1
    %367 = vsyncpa [#allocation5], 1

</llo_original>
